<compile_context>
chip_gen: v7x
topology: tpu7x:2x2x1
jax: 0.10.0
libtpu: 0.0.40
codegen_flags: <defaults>
</compile_context>

<pallas_src>
import functools

import jax
import jax.numpy as jnp
from jax.experimental import pallas as pl
from jax.experimental.pallas import tpu as pltpu


def _round_up(x, m):
    return ((x + m - 1) // m) * m


def _cdiv(a, b):
    return -(-a // b)


# ---------------------------------------------------------------------------
# Kernel 1: fused Linear (1x1 conv) + MaxPool1d(kernel=stride=s, ceil_mode=True)
# ---------------------------------------------------------------------------
def _linear_maxpool_kernel(x_ref, w_ref, b_ref, o_ref, *, s, n, tm):
    # x_ref: (tm*s, Cin)   w_ref: (Cin, Cout_pad)   b_ref: (1, Cout_pad)
    # o_ref: (tm, Cout_pad)
    y = jnp.dot(x_ref[...], w_ref[...], preferred_element_type=jnp.float32)
    y = y + b_ref[...]
    if n % s:
        # ceil_mode tail: node rows >= n inside this batch (boundary-block garbage
        # or the ceil padding) must not win the max.
        row0 = pl.program_id(1) * (tm * s)
        rid = row0 + jax.lax.broadcasted_iota(jnp.int32, (tm * s, 1), 0)
        y = jnp.where(rid < n, y, -jnp.inf)
    # Rows whose pooled index is >= ceil(n/s) are dropped by the boundary store.
    y = jnp.max(y.reshape(tm, s, y.shape[-1]), axis=1)
    o_ref[...] = y.astype(o_ref.dtype)


def fold_linear_params(weight, bias, lane=128):
    """Fold PyTorch Linear params once (hoisted out of the per-call path).

    weight: (Cout, Cin), bias: (Cout,) -> (Cin, Cout_pad), (1, Cout_pad) with
    Cout padded to a multiple of `lane` so kernel stores are lane-dense.
    """
    cout, cin = weight.shape
    cout_pad = _round_up(cout, lane)
    w = jnp.zeros((cin, cout_pad), weight.dtype).at[:, :cout].set(weight.T)
    b = jnp.zeros((1, cout_pad), bias.dtype).at[:, :cout].set(bias)
    return w, b


def _pick_node_tile(m, s, cin, cout_pad, batch):
    per_row = 4 * (s * cin + cout_pad)            # ~bytes per pooled output row
    tm = max(8, min(1024, (4 * 1024 * 1024 // per_row) // 8 * 8))
    tm = min(tm, _round_up(m, 8))
    if batch == 1 and m > 8:                      # v7x: keep >= 2 grid steps
        tm = min(tm, _round_up(_cdiv(m, 2), 8))
    return tm


def _linear_maxpool(nodes, w_folded, b_folded, s):
    """nodes: (B, N, Cin) -> (B, ceil(N/s), Cout_pad). No HBM-side padding."""
    B, N, Cin = nodes.shape
    cin_w, cout_pad = w_folded.shape
    assert cin_w == Cin
    M = _cdiv(N, s)
    TM = _pick_node_tile(M, s, Cin, cout_pad, B)
    grid = (B, _cdiv(M, TM))

    kernel = functools.partial(_linear_maxpool_kernel, s=s, n=N, tm=TM)
    out = pl.pallas_call(
        kernel,
        out_shape=jax.ShapeDtypeStruct((B, M, cout_pad), nodes.dtype),
        grid_spec=pltpu.PrefetchScalarGridSpec(
            num_scalar_prefetch=0,
            grid=grid,
            in_specs=[
                pl.BlockSpec((None, TM * s, Cin), lambda b, t: (b, t, 0)),
                # Constant across the grid -> fetched once, stays resident.
                pl.BlockSpec((Cin, cout_pad), lambda b, t: (0, 0)),
                pl.BlockSpec((1, cout_pad), lambda b, t: (0, 0)),
            ],
            out_specs=pl.BlockSpec((None, TM, cout_pad), lambda b, t: (b, t, 0)),
        ),
        compiler_params=pltpu.CompilerParams(
            dimension_semantics=("parallel", "parallel"),
            vmem_limit_bytes=32 * 1024 * 1024,
        ),
    )(nodes, w_folded, b_folded)
    return out                                    # (B, M, Cout_pad)


# ---------------------------------------------------------------------------
# Kernel 2: fused MaxPool2d(s, ceil_mode=True) on the adjacency, single pass.
# ---------------------------------------------------------------------------
def _adj_pool_kernel(a_ref, o_ref, *, s, n, w, tr, transposed_out):
    # a_ref: (tr*s, w) slab of full adjacency rows (w >= n, lane aligned).
    x = a_ref[...].astype(jnp.float32)
    if n % s:
        # ceil_mode: rows/cols in [n, n_pad) (garbage lanes / boundary rows)
        # must not win the max for the tail pooling window.
        row0 = pl.program_id(1) * (tr * s)
        rid = row0 + jax.lax.broadcasted_iota(jnp.int32, (tr * s, 1), 0)
        cid = jax.lax.broadcasted_iota(jnp.int32, (1, w), 1)
        x = jnp.where((rid < n) & (cid < n), x, -jnp.inf)
    # Pool over groups of s adjacent rows (sublane groups).
    z = jnp.max(x.reshape(tr, s, w), axis=1)               # (tr, w)
    if transposed_out:
        # Aligned XLU transpose, then the column groups become sublane groups.
        zt = z.T                                           # (w, tr)
        out = jnp.max(zt.reshape(w // s, s, tr), axis=1)   # (w//s, tr) == OUT^T
    else:
        # Fallback variant: pool the lane dim with a reshape.
        out = jnp.max(z.reshape(tr, w // s, s), axis=-1)   # (tr, w//s) == OUT
    o_ref[...] = out.astype(o_ref.dtype)


def _pick_adj_tile(m, s, w, batch):
    tr = 512
    while tr > 128 and tr * s * w * 4 > 6 * 1024 * 1024:
        tr //= 2
    tr = max(128, min(tr, _round_up(m, 128)))     # 128 needed for lane-dense out
    if batch == 1 and m > 128:                    # v7x: keep >= 2 grid steps
        tr = max(128, min(tr, _round_up(_cdiv(m, 2), 128)))
    return tr


def _adj_maxpool2d_pallas(adj, s, transposed_out):
    B, N, _ = adj.shape
    M = _cdiv(N, s)
    n_pad = M * s
    # Block column width: lane aligned, divisible by s, covers all N columns.
    W = _round_up(n_pad, 128)
    while W % s:
        W += 128
    TR = _pick_adj_tile(M, s, W, B)
    grid = (B, _cdiv(M, TR))
    RT = grid[1] * TR

    kernel = functools.partial(_adj_pool_kernel, s=s, n=N, w=W, tr=TR,
                               transposed_out=transposed_out)
    if transposed_out:
        # Transposed output: last dim = TR (multiple of 128) -> unmasked, fully
        # lane-dense stores.  The tiny (M x M) swapaxes below restores layout.
        out_shape = jax.ShapeDtypeStruct((B, W // s, RT), adj.dtype)
        out_spec = pl.BlockSpec((None, W // s, TR), lambda b, i: (b, 0, i))
    else:
        out_shape = jax.ShapeDtypeStruct((B, M, W // s), adj.dtype)
        out_spec = pl.BlockSpec((None, TR, W // s), lambda b, i: (b, i, 0))

    out = pl.pallas_call(
        kernel,
        out_shape=out_shape,
        grid_spec=pltpu.PrefetchScalarGridSpec(
            num_scalar_prefetch=0,
            grid=grid,
            in_specs=[pl.BlockSpec((None, TR * s, W), lambda b, i: (b, i, 0))],
            out_specs=out_spec,
        ),
        compiler_params=pltpu.CompilerParams(
            dimension_semantics=("parallel", "parallel"),
            vmem_limit_bytes=32 * 1024 * 1024,
        ),
    )(adj)

    if transposed_out:
        return jnp.swapaxes(out[:, :M, :M], 1, 2)
    return out[:, :M, :M]


def _adj_maxpool2d(adj, s):
    """adj: (B, N, N) -> (B, ceil(N/s), ceil(N/s)), MaxPool2d(s, ceil_mode=True)."""
    # Preferred: fused kernel with an aligned in-kernel transpose between the two
    # pools (lane-dense output).  Fallback: same kernel pooling lanes via reshape.
    for transposed_out in (True, False):
        try:
            return jax.block_until_ready(
                _adj_maxpool2d_pallas(adj, s, transposed_out))
        except Exception:
            continue
    # TODO(synk): last-resort pure-JAX fallback, only reached if neither in-kernel
    # lane<->sublane exchange (transpose / lane-split reshape) lowers on this
    # Mosaic version.
    B, N, _ = adj.shape
    M = _cdiv(N, s)
    a = jnp.pad(adj, ((0, 0), (0, M * s - N), (0, M * s - N)),
                constant_values=-jnp.inf)
    return a.reshape(B, M, s, M, s).max(axis=(2, 4))


def graph_pool_forward(nodes, adj, w_folded, b_folded, size_factor, output_dim):
    """nodes: (B, N, Cin); adj: (B, N, N); w_folded/b_folded from fold_linear_params.
    Returns (nodes_pooled (B, ceil(N/s), output_dim), adj_pooled (B, ceil(N/s), ceil(N/s)))."""
    s = size_factor
    pooled = _linear_maxpool(nodes, w_folded, b_folded, s)     # (B, M, Cout_pad)
    nodes_out = pooled[..., :output_dim]
    adj_out = _adj_maxpool2d(adj, s)
    return nodes_out, adj_out


if __name__ == "__main__":
    # Small shapes consistent with the module; N not divisible by s exercises
    # ceil_mode on both pools.
    B, N = 2, 18
    Cin, Cout, size_factor = 32, 16, 4

    key = jax.random.PRNGKey(0)
    k_x, k_a, k_w, k_b = jax.random.split(key, 4)

    nodes = jax.random.normal(k_x, (B, N, Cin), dtype=jnp.float32)
    adj = jax.random.normal(k_a, (B, N, N), dtype=jnp.float32)

    bound = 1.0 / (Cin ** 0.5)
    weight = jax.random.uniform(k_w, (Cout, Cin), minval=-bound, maxval=bound,
                                dtype=jnp.float32)     # PyTorch Linear layout
    bias = jax.random.uniform(k_b, (Cout,), minval=-bound, maxval=bound,
                              dtype=jnp.float32)

    # Fold/pad Linear params once (hoisted out of the per-call path).
    w_folded, b_folded = fold_linear_params(weight, bias)

    nodes_out, adj_out = graph_pool_forward(nodes, adj, w_folded, b_folded,
                                            size_factor, Cout)
    nodes_out = jax.block_until_ready(nodes_out)
    adj_out = jax.block_until_ready(adj_out)

    M = -(-N // size_factor)
    assert nodes_out.shape == (B, M, Cout)
    assert adj_out.shape == (B, M, M)

    # Pure-JAX reference (matches PyTorch Linear + MaxPool1d/2d, ceil_mode=True).
    y = jnp.einsum("bnc,oc->bno", nodes, weight) + bias
    y_pad = jnp.pad(y, ((0, 0), (0, M * size_factor - N), (0, 0)),
                    constant_values=-jnp.inf)
    ref_nodes = y_pad.reshape(B, M, size_factor, Cout).max(axis=2)

    a_pad = jnp.pad(adj, ((0, 0), (0, M * size_factor - N),
                          (0, M * size_factor - N)),
                    constant_values=-jnp.inf)
    ref_adj = a_pad.reshape(B, M, size_factor, M, size_factor).max(axis=(2, 4))

    assert jnp.allclose(nodes_out, ref_nodes, atol=1e-5, rtol=1e-5)
    assert jnp.allclose(adj_out, ref_adj, atol=1e-5, rtol=1e-5)

    print("KERNEL_OK")
</pallas_src>

<mosaic_0001>
module attributes {stable_mosaic.version = 11 : i64} {
  func.func @_linear_maxpool_kernel(%arg0: i32, %arg1: i32, %arg2: memref<1x32x32xf32, #tpu.memory_space<vmem>>, %arg3: memref<32x128xf32, #tpu.memory_space<vmem>>, %arg4: memref<1x128xf32, #tpu.memory_space<vmem>>, %arg5: memref<1x8x128xf32, #tpu.memory_space<vmem>>) attributes {dimension_semantics = [#tpu.dimension_semantics<parallel>, #tpu.dimension_semantics<parallel>], iteration_bounds = array<i64: 2, 1>, scalar_prefetch = 0 : i64, scratch_operands = 0 : i64, tpu.core_type = #tpu.core_type<tc>, window_params = [{transform_indices = @transform_0, window_bounds = array<i64: 1, 32, 32>}, {pipeline_mode = #tpu.pipeline_mode<synchronous>, transform_indices = @transform_1, window_bounds = array<i64: 32, 128>}, {pipeline_mode = #tpu.pipeline_mode<synchronous>, transform_indices = @transform_2, window_bounds = array<i64: 1, 128>}, {transform_indices = @transform_3, window_bounds = array<i64: 1, 8, 128>}]} {
    %c0 = arith.constant 0 : index
    %c0_0 = arith.constant 0 : index
    %c0_1 = arith.constant 0 : index
    %0 = vector.load %arg2[%c0, %c0_0, %c0_1] : memref<1x32x32xf32, #tpu.memory_space<vmem>>, vector<1x32x32xf32>
    %1 = vector.shape_cast %0 : vector<1x32x32xf32> to vector<32x32xf32>
    %c0_2 = arith.constant 0 : index
    %c0_3 = arith.constant 0 : index
    %2 = vector.load %arg3[%c0_2, %c0_3] : memref<32x128xf32, #tpu.memory_space<vmem>>, vector<32x128xf32>
    %cst = arith.constant dense<0.000000e+00> : vector<32x128xf32>
    %3 = tpu.matmul %1, %2, %cst {dimension_numbers = #tpu.dot_dimension_numbers<[1], [0], [0], [1], [0, 0, 1, 1], [], []>} : vector<32x32xf32>, vector<32x128xf32>, vector<32x128xf32> -> vector<32x128xf32>
    %c0_4 = arith.constant 0 : index
    %c0_5 = arith.constant 0 : index
    %4 = vector.load %arg4[%c0_4, %c0_5] : memref<1x128xf32, #tpu.memory_space<vmem>>, vector<1x128xf32>
    %5 = vector.broadcast %4 : vector<1x128xf32> to vector<32x128xf32>
    %6 = arith.addf %3, %5 : vector<32x128xf32>
    %c32_i32 = arith.constant 32 : i32
    %7 = arith.muli %arg1, %c32_i32 : i32
    %8 = tpu.iota {dimensions = array<i32: 0>} : vector<32x1xi32>
    %9 = vector.broadcast %7 : i32 to vector<32x1xi32>
    %10 = arith.addi %9, %8 : vector<32x1xi32>
    %c18_i32 = arith.constant 18 : i32
    %11 = vector.broadcast %c18_i32 : i32 to vector<32x1xi32>
    %12 = arith.cmpi slt, %10, %11 : vector<32x1xi32>
    %cst_6 = arith.constant 0xFF800000 : f32
    %13 = vector.shape_cast %12 : vector<32x1xi1> to vector<32x1xi1>
    %14 = vector.broadcast %13 : vector<32x1xi1> to vector<32x128xi1>
    %15 = vector.broadcast %cst_6 : f32 to vector<32x128xf32>
    %16 = arith.select %14, %6, %15 : vector<32x128xi1>, vector<32x128xf32>
    %17 = vector.shape_cast %16 : vector<32x128xf32> to vector<8x4x128xf32>
    %cst_7 = arith.constant dense<0xFF800000> : vector<8x128xf32>
    %18 = vector.multi_reduction <maximumf>, %17, %cst_7 [1] : vector<8x4x128xf32> to vector<8x128xf32>
    %c0_8 = arith.constant 0 : index
    %c0_9 = arith.constant 0 : index
    %c0_10 = arith.constant 0 : index
    %19 = vector.load %arg5[%c0_8, %c0_9, %c0_10] : memref<1x8x128xf32, #tpu.memory_space<vmem>>, vector<1x8x128xf32>
    %20 = vector.shape_cast %19 : vector<1x8x128xf32> to vector<8x128xf32>
    %21 = vector.shape_cast %18 : vector<8x128xf32> to vector<1x8x128xf32>
    tpu.vector_store %arg5[%c0_8, %c0_9, %c0_10], %21 {strides = array<i32>} : memref<1x8x128xf32, #tpu.memory_space<vmem>>, vector<1x8x128xf32>,
    return
  }
  func.func @transform_0(%arg0: i32, %arg1: i32) -> (i32, i32, i32) {
    %c0_i32 = arith.constant 0 : i32
    %c0_i32_0 = arith.constant 0 : i32
    return %arg0, %arg1, %c0_i32 : i32, i32, i32
  }
  func.func @transform_1(%arg0: i32, %arg1: i32) -> (i32, i32) {
    %c0_i32 = arith.constant 0 : i32
    %c0_i32_0 = arith.constant 0 : i32
    %c0_i32_1 = arith.constant 0 : i32
    return %c0_i32, %c0_i32_0 : i32, i32
  }
  func.func @transform_2(%arg0: i32, %arg1: i32) -> (i32, i32) {
    %c0_i32 = arith.constant 0 : i32
    %c0_i32_0 = arith.constant 0 : i32
    %c0_i32_1 = arith.constant 0 : i32
    return %c0_i32, %c0_i32_0 : i32, i32
  }
  func.func @transform_3(%arg0: i32, %arg1: i32) -> (i32, i32, i32) {
    %c0_i32 = arith.constant 0 : i32
    %c0_i32_0 = arith.constant 0 : i32
    return %arg0, %arg1, %c0_i32 : i32, i32, i32
  }
}

</mosaic_0001>

<llo_original>
// kernel: tpu_custom_call.1
$region0: #{tpu_custom_call.1}
  #allocation0 [shape = 'u32[]', space=smem, size = 0x4, offset = 0x4, fixed_abs, tag = 'smem constant byte address 0x4 - core index']
  #allocation1 [shape = 'u32[144,128]{1,0:T(1,128)}', space=vmem, size = 0x12000, scoped, tag = 'internal scratch']
  %s0 = inlined_call_operand.vmem [shape: f32[2,18,32], index: 0, kind: input, shape index: {}]
  %s1 = inlined_call_operand.vmem [shape: f32[32,128], index: 1, kind: input, shape index: {}]
  %s2 = inlined_call_operand.vmem [shape: f32[1,128], index: 2, kind: input, shape index: {}]
  %s3 = inlined_call_operand.vmem [shape: f32[2,5,128], index: 3, kind: output, shape index: {}]
  %s4 = sld [smem:[#allocation0]]
  $region45: #{tpu_custom_call.1} parent=0
    _
  %s6 = ssub.s32 1, %s4
  %s7 = scalar_select 0, %s6, %s4
  loop: start=0, step=1, limit=4
  $region2: #{tpu_custom_call.1} parent=0 // loop_pre_header
    _
  $region3: #{tpu_custom_call.1} parent=0 // loop_header
    %s9 = sphi 0, %s13
    %p10 = scmp.ge.s32.totalorder %s9, 4
    %s16 = sphi 0, %s28
    %s17 = sphi 0, %s24
    %s18 = sphi 0, %s16
    %s19 = sphi 0, %s17
    %s20 = sphi 0, %s18
    %s21 = sphi 0, %s19
    %s33 = sphi 0, %s35
    %s36 = sphi 0, %s33
    %s37 = sphi 0, %s36
    %s53 = sphi 0, %s37
    %s57 = sphi 0, %s57
    %s59 = sphi 0, %s57
    %s60 = sphi 0, %s59
    %s74 = sphi 0, %s60
    %s78 = sphi 0, %s78
    %s80 = sphi 0, %s78
    %s81 = sphi 0, %s80
    %s95 = sphi 0, %s81
    %s103 = sphi 0, %s105
    %s106 = sphi 0, %s103
    %s107 = sphi 0, %s106
    %s123 = sphi 0, %s107
  $region4: #{tpu_custom_call.1} parent=0 // loop_header_branch
    %12 = sbr.rel (%p10) target = $region8
  $region5: #{tpu_custom_call.1} parent=0 // loop_body
    %s14 = ssub.s32 %s9, 1
    %s15 = ssub.s32 %s9, 2
    %s22 = sadd.s32 1, %s17
    %p23 = scmp.ge.s32.totalorder %s22, 1
    %s24 = scalar_select %p23, 0, %s22
    %s25 = sadd.s32 1, %s16
    %s26 = scalar_select %p23, %s25, %s16
    %p27 = scmp.ge.s32.totalorder %s26, 2
    %s28 = scalar_select %p27, 0, %s26
    %s29 = ssub.s32 %s16, %s28
    %s30 = ssub.s32 %s17, %s24
    %s31 = sor.u32 %s29, %s30
    %p32 = scmp.eq.s32.totalorder %s31, 0
    %s34 = sadd.s32 %s33, 1
    %s35 = scalar_select %p32, %s33, %s34
    %p38 = pneg %p32
    %p39 = scmp.eq.s32.totalorder %s9, 1
    %p40 = por %p38, %p39
    %p41 = scmp.ne.s32.totalorder %s33, %s36
    %p42 = scmp.eq.s32.totalorder %s9, 0
    %p43 = por %p41, %p42
    %p44 = scmp.ne.s32.totalorder %s33, %s36
    %p45 = scmp.eq.s32.totalorder %s14, 1
    %p46 = por %p44, %p45
    %p47 = scmp.ne.s32.totalorder %s36, %s37
    %p48 = scmp.eq.s32.totalorder %s14, 0
    %p49 = por %p47, %p48
    %p50 = scmp.ne.s32.totalorder %s36, %s37
    %p51 = scmp.eq.s32.totalorder %s15, 1
    %p52 = por %p50, %p51
    %p54 = scmp.ne.s32.totalorder %s37, %s53
    %p55 = scmp.eq.s32.totalorder %s15, 0
    %p56 = por %p54, %p55
    %s58 = sadd.s32 %s57, 1
    %p61 = scmp.eq.s32.totalorder %s9, 1
    %p62 = scmp.ne.s32.totalorder %s57, %s59
    %p63 = scmp.eq.s32.totalorder %s9, 0
    %p64 = por %p62, %p63
    %p65 = scmp.ne.s32.totalorder %s57, %s59
    %p66 = scmp.eq.s32.totalorder %s14, 1
    %p67 = por %p65, %p66
    %p68 = scmp.ne.s32.totalorder %s59, %s60
    %p69 = scmp.eq.s32.totalorder %s14, 0
    %p70 = por %p68, %p69
    %p71 = scmp.ne.s32.totalorder %s59, %s60
    %p72 = scmp.eq.s32.totalorder %s15, 1
    %p73 = por %p71, %p72
    %p75 = scmp.ne.s32.totalorder %s60, %s74
    %p76 = scmp.eq.s32.totalorder %s15, 0
    %p77 = por %p75, %p76
    %s79 = sadd.s32 %s78, 1
    %p82 = scmp.eq.s32.totalorder %s9, 1
    %p83 = scmp.ne.s32.totalorder %s78, %s80
    %p84 = scmp.eq.s32.totalorder %s9, 0
    %p85 = por %p83, %p84
    %p86 = scmp.ne.s32.totalorder %s78, %s80
    %p87 = scmp.eq.s32.totalorder %s14, 1
    %p88 = por %p86, %p87
    %p89 = scmp.ne.s32.totalorder %s80, %s81
    %p90 = scmp.eq.s32.totalorder %s14, 0
    %p91 = por %p89, %p90
    %p92 = scmp.ne.s32.totalorder %s80, %s81
    %p93 = scmp.eq.s32.totalorder %s15, 1
    %p94 = por %p92, %p93
    %p96 = scmp.ne.s32.totalorder %s81, %s95
    %p97 = scmp.eq.s32.totalorder %s15, 0
    %p98 = por %p96, %p97
    %s99 = ssub.s32 %s16, %s28
    %s100 = ssub.s32 %s17, %s24
    %s101 = sor.u32 %s99, %s100
    %p102 = scmp.eq.s32.totalorder %s101, 0
    %s104 = sadd.s32 %s103, 1
    %s105 = scalar_select %p102, %s103, %s104
    %p108 = pneg %p102
    %p109 = scmp.eq.s32.totalorder %s9, 1
    %p110 = por %p108, %p109
    %p111 = scmp.ne.s32.totalorder %s103, %s106
    %p112 = scmp.eq.s32.totalorder %s9, 0
    %p113 = por %p111, %p112
    %p114 = scmp.ne.s32.totalorder %s103, %s106
    %p115 = scmp.eq.s32.totalorder %s14, 1
    %p116 = por %p114, %p115
    %p117 = scmp.ne.s32.totalorder %s106, %s107
    %p118 = scmp.eq.s32.totalorder %s14, 0
    %p119 = por %p117, %p118
    %p120 = scmp.ne.s32.totalorder %s106, %s107
    %p121 = scmp.eq.s32.totalorder %s15, 1
    %p122 = por %p120, %p121
    %p124 = scmp.ne.s32.totalorder %s107, %s123
    %p125 = scmp.eq.s32.totalorder %s15, 0
    %p126 = por %p124, %p125
    %p127 = scmp.le.s32.totalorder 1, %s9
    %p128 = scmp.lt.s32.totalorder %s9, 3
    %p129 = pnand %p127, %p128
    %p130 = pneg %p129
    // Predicated region
    $region9: #{tpu_custom_call.1} parent=5 // pred_check
      _
    $region10: #{tpu_custom_call.1} parent=5 // pred_check_branch
      %132 = sbr.rel (%p129) target = $region12
    $region11: #{tpu_custom_call.1} parent=5 // pred_region
      %s133 = ssub.s32 %s9, 1
      // Predicated region
      $region13: #{tpu_custom_call.1} parent=11 // pred_check
        %p134 = pneg %p70
      $region14: #{tpu_custom_call.1} parent=11 // pred_check_branch
        %136 = sbr.rel (%p134) target = $region16
      $region15: #{tpu_custom_call.1} parent=11 // pred_region
        _
      $region16: #{tpu_custom_call.1} parent=11 // pred_fallthru
        _
      // Predicated region
      $region17: #{tpu_custom_call.1} parent=11 // pred_check
        %p137 = pneg %p91
      $region18: #{tpu_custom_call.1} parent=11 // pred_check_branch
        %139 = sbr.rel (%p137) target = $region20
      $region19: #{tpu_custom_call.1} parent=11 // pred_region
        _
      $region20: #{tpu_custom_call.1} parent=11 // pred_fallthru
        _
    $region12: #{tpu_custom_call.1} parent=5 // pred_fallthru
      _
    %p140 = scmp.lt.s32.totalorder %s9, 2
    // Predicated region
    $region21: #{tpu_custom_call.1} parent=5 // pred_check
      %p141 = pneg %p140
    $region22: #{tpu_custom_call.1} parent=5 // pred_check_branch
      %143 = sbr.rel (%p141) target = $region24
    $region23: #{tpu_custom_call.1} parent=5 // pred_region
      // Predicated region
      $region25: #{tpu_custom_call.1} parent=23 // pred_check
        %p144 = pneg %p43
      $region26: #{tpu_custom_call.1} parent=23 // pred_check_branch
        %146 = sbr.rel (%p144) target = $region28
      $region27: #{tpu_custom_call.1} parent=23 // pred_region
        %s147 = smul.u32 4, %s17
        %s148 = ssub.s32 3, %s147
        %s149 = smul.u32 128, %s148
        %p150 = scmp.lt.s32.totalorder %s16, 1
        %s151 = scalar_select %p150, %s16, 1
        %p152 = scmp.lt.s32.totalorder %s147, 2
        %s153 = scalar_select %p152, %s147, 2
        %s154 = smul.addr %s151, 3
        %s155 = sadd.s32 %s153, %s154
        %s156 = smul.addr %s155, 8
        %s157 = scalar_lea.vmem %s0, %s156
        %s158 = smul.u32 4, %s17
        %s159 = ssub.s32 3, %s158
        %s160 = smul.u32 128, %s159
      $region28: #{tpu_custom_call.1} parent=23 // pred_fallthru
        _
    $region24: #{tpu_custom_call.1} parent=5 // pred_fallthru
      _
    %p161 = scmp.le.s32.totalorder 1, %s9
    %p162 = scmp.lt.s32.totalorder %s9, 3
    %p163 = pnand %p161, %p162
    %p164 = pneg %p163
    // Predicated region
    $region29: #{tpu_custom_call.1} parent=5 // pred_check
      _
    $region30: #{tpu_custom_call.1} parent=5 // pred_check_branch
      %166 = sbr.rel (%p163) target = $region32
    $region31: #{tpu_custom_call.1} parent=5 // pred_region
      %s167 = ssub.s32 %s9, 1
      %s168 = smul.u32 4, %s19
      %s169 = ssub.s32 3, %s168
      %s170 = smul.u32 128, %s169
      %p171 = scmp.lt.s32.totalorder %s18, 1
      %s172 = scalar_select %p171, %s18, 1
      %p173 = scmp.lt.s32.totalorder %s168, 2
      %s174 = scalar_select %p173, %s168, 2
      %s175 = smul.addr %s172, 3
      %s176 = sadd.s32 %s174, %s175
      %s177 = smul.addr %s176, 8
      %s178 = scalar_lea.vmem %s0, %s177
      %p179 = pneg %p49
      %p180 = pneg %p46
      %p181 = pneg %p70
      %p182 = pneg %p67
      %p183 = pneg %p91
      %p184 = pneg %p88
      %p185 = pneg %p119
      %p186 = pneg %p116
      %p187 = scmp.lt.s32.totalorder %s18, 1
      %s188 = scalar_select %p187, %s18, 1
      %p189 = scmp.lt.s32.totalorder %s19, 0
      %s190 = scalar_select %p189, %s19, 0
      %s191 = sadd.s32 %s190, %s188
      %s192 = smul.addr %s191, 8
      %s193 = scalar_lea.vmem %s3, %s192
      %s194 = smul.u32 4, %s19
      %s195 = ssub.s32 3, %s194
      %s196 = smul.u32 128, %s195
      %p197 = scmp.lt.s32.totalorder %s18, 1
      %s198 = scalar_select %p197, %s18, 1
      %p199 = scmp.lt.s32.totalorder %s194, 2
      %s200 = scalar_select %p199, %s194, 2
      %s201 = smul.addr %s198, 3
      %s202 = sadd.s32 %s200, %s201
      %s203 = smul.addr %s202, 8
      %s204 = scalar_lea.vmem %s0, %s203
      %s205 = smul.u32 4, %s19
      %s206 = ssub.s32 3, %s205
      %s207 = smul.u32 128, %s206
      %p208 = scmp.lt.s32.totalorder %s18, 1
      %s209 = scalar_select %p208, %s18, 1
      %p210 = scmp.lt.s32.totalorder %s19, 0
      %s211 = scalar_select %p210, %s19, 0
      %s212 = sadd.s32 %s211, %s209
      %s213 = smul.addr %s212, 8
      %s214 = scalar_lea.vmem %s3, %s213
      %v215 = vld [vmem:[%s204] sm:$0xff]
      %v216 = vld [vmem:[%s204 + $0x8] sm:$0xff]
      %v217 = vld [vmem:[%s204 + $0x10] sm:$0xff]
      %v218 = vld [vmem:[%s204 + $0x18] sm:$0xff]
      %v219 = vld [vmem:[%s1] sm:$0xff]
      %v220 = vld [vmem:[%s1 + $0x8] sm:$0xff]
      %v221 = vld [vmem:[%s1 + $0x10] sm:$0xff]
      %v222 = vld [vmem:[%s1 + $0x18] sm:$0xff]
      %v223 = vld [vmem:[%s2] sm:$0x1]
      %v225 = vlaneseq
      %v226 = vshrl.u32 %v225, 7
      %v227 = vsub.s32 0, %v226
      %v228 = vrot.slane %v223, %v227
      %vm230 = vcmask 261120
      %v232 = vsel %vm230, %v215, 0
      %v235 = vsel %vm230, %v216, 0
      %v238 = vsel %vm230, %v217, 0
      %v241 = vsel %vm230, %v218, 0
      %243 = vmatprep.subr.mxu0 0.0
      %244 = vmatpush1.msra.mxu0 %v219
      %245 = vmatprep.subr.mxu0 0.0
      %246 = vmatpush1.msra.mxu0 %v220
      %247 = vmatprep.subr.mxu0 0.0
      %248 = vmatpush1.msra.mxu0 %v221
      %249 = vmatprep.subr.mxu0 0.0
      %250 = vmatpush1.msra.mxu0 %v222
      %251 = vmatprep.subr.mxu0 0.0
      %252 = vmatpush1.msra.mxu0 0.0
      %253 = vmatprep.subr.mxu0 0.0
      %254 = vmatpush1.msra.mxu0 0.0
      %255 = vmatprep.subr.mxu0 0.0
      %256 = vmatpush1.msra.mxu0 0.0
      %257 = vmatprep.subr.mxu0 0.0
      %258 = vmatpush1.msra.mxu0 0.0
      %259 = vmatprep.subr.mxu0 0.0
      %260 = vmatpush1.msra.mxu0 0.0
      %261 = vmatprep.subr.mxu0 0.0
      %262 = vmatpush1.msra.mxu0 0.0
      %263 = vmatprep.subr.mxu0 0.0
      %264 = vmatpush1.msra.mxu0 0.0
      %265 = vmatprep.subr.mxu0 0.0
      %266 = vmatpush1.msra.mxu0 0.0
      %267 = vmatprep.subr.mxu0 0.0
      %268 = vmatpush1.msra.mxu0 0.0
      %269 = vmatprep.subr.mxu0 0.0
      %270 = vmatpush1.msra.mxu0 0.0
      %271 = vmatprep.subr.mxu0 0.0
      %272 = vmatpush1.msra.mxu0 0.0
      %273 = vmatprep.subr.mxu0 0.0
      %274 = vmatpush1.msra.mxu0 0.0
      %275 = vmatprep.subr.mxu0 0.0
      %276 = vmatpush1.msra.mxu0 0.0
      %277 = vmatprep.subr.mxu0 0.0
      %278 = vmatpush1.msra.mxu0 0.0
      %279 = vmatprep.subr.mxu0 0.0
      %280 = vmatpush1.msra.mxu0 0.0
      %281 = vmatprep.subr.mxu0 0.0
      %282 = vmatpush1.msra.mxu0 0.0
      %283 = vmatprep.subr.mxu0 0.0
      %284 = vmatpush1.msra.mxu0 0.0
      %285 = vmatprep.subr.mxu0 0.0
      %286 = vmatpush1.msra.mxu0 0.0
      %287 = vmatprep.subr.mxu0 0.0
      %288 = vmatpush1.msra.mxu0 0.0
      %289 = vmatprep.subr.mxu0 0.0
      %290 = vmatpush1.msra.mxu0 0.0
      %291 = vmatprep.subr.mxu0 0.0
      %292 = vmatpush1.msra.mxu0 0.0
      %293 = vmatprep.subr.mxu0 0.0
      %294 = vmatpush1.msra.mxu0 0.0
      %295 = vmatprep.subr.mxu0 0.0
      %296 = vmatpush1.msra.mxu0 0.0
      %297 = vmatprep.subr.mxu0 0.0
      %298 = vmatpush1.msra.mxu0 0.0
      %299 = vmatprep.subr.mxu0 0.0
      %300 = vmatpush1.msra.mxu0 0.0
      %301 = vmatprep.subr.mxu0 0.0
      %302 = vmatpush1.msra.mxu0 0.0
      %303 = vmatprep.subr.mxu0 0.0
      %304 = vmatpush1.msra.mxu0 0.0
      %305 = vmatprep.subr.mxu0 0.0
      %306 = vmatpush1.msra.mxu0 0.0
      %307 = vmatprep.mubr.f32.mxu0 0.0
      %308 = vmatmul.mubr.f32.gmra.mrb[0].mxu0 %v232
      %v309 = vpop.f32.mrb[0].mxu0
      %v310 = vadd.f32 %v228, %v309
      %v311 = vpop.f32.mrb[0].mxu0
      %312 = vmatprep.mubr.f32.mxu0 0.0
      %313 = vmatmul.mubr.f32.gmra.mrb[0].mxu0 %v235
      %v314 = vpop.f32.mrb[0].mxu0
      %v315 = vadd.f32 %v228, %v314
      %v316 = vpop.f32.mrb[0].mxu0
      %317 = vmatprep.mubr.f32.mxu0 0.0
      %318 = vmatmul.mubr.f32.gmra.mrb[0].mxu0 %v238
      %v319 = vpop.f32.mrb[0].mxu0
      %v320 = vadd.f32 %v228, %v319
      %v321 = vpop.f32.mrb[0].mxu0
      %322 = vmatprep.mubr.f32.mxu0 0.0
      %323 = vmatmul.mubr.f32.gmra.mrb[0].mxu0 %v241
      %v324 = vpop.f32.mrb[0].mxu0
      %v325 = vadd.f32 %v228, %v324
      %v326 = vpop.f32.mrb[0].mxu0
      %327 = vdwg.mxu0
      %s328 = smul.u32 %s19, 32
      %v329 = vlaneseq
      %v330 = vshrl.u32 %v329, 7
      %v331 = vadd.s32 %v330, 8
      %v332 = vadd.s32 %v330, 16
      %v333 = vadd.s32 %v330, 24
      %v334 = vstv %s328
      %v335 = vadd.s32 %v334, %v330
      %v336 = vadd.s32 %v334, %v331
      %v337 = vadd.s32 %v334, %v332
      %v338 = vadd.s32 %v334, %v333
      %vm339 = vcmp.lt.s32.totalorder %v335, 18
      %vm340 = vcmp.lt.s32.totalorder %v336, 18
      %vm341 = vcmp.lt.s32.totalorder %v337, 18
      %vm342 = vcmp.lt.s32.totalorder %v338, 18
      %v343 = vsel %vm339, 1, 0
      %v344 = vsel %vm340, 1, 0
      %v345 = vsel %vm341, 1, 0
      %v346 = vsel %vm342, 1, 0
      %vm347 = vcmp.eq.s32.totalorder %v343, 1
      %vm348 = vcmp.eq.s32.totalorder %v344, 1
      %vm349 = vcmp.eq.s32.totalorder %v345, 1
      %vm350 = vcmp.eq.s32.totalorder %v346, 1
      %v351 = vsel %vm347, %v310, -inf
      %v352 = vsel %vm348, %v315, -inf
      %v353 = vsel %vm349, %v320, -inf
      %v354 = vsel %vm350, %v325, -inf
      %v359 = vcombine.high %v351, %v351
      %v360 = vcombine.high %v352, %v352
      %v361 = vcombine.high %v353, %v353
      %v362 = vcombine.high %v354, %v354
      %vm367 = vcmask 1043456
      %v368 = vsel %vm367, %v351, -inf
      %v369 = vrot.slane %v368, 4
      %v370 = vmax.f32 %v368, %v369
      %v371 = vrot.slane %v370, 2
      %v372 = vmax.f32 %v370, %v371
      %v373 = vrot.slane %v372, 1
      %v374 = vmax.f32 %v372, %v373
      %v375 = vsel %vm367, %v359, -inf
      %v376 = vrot.slane %v375, 4
      %v377 = vmax.f32 %v375, %v376
      %v378 = vrot.slane %v377, 2
      %v379 = vmax.f32 %v377, %v378
      %v380 = vrot.slane %v379, 1
      %v381 = vmax.f32 %v379, %v380
      %v382 = vsel %vm367, %v352, -inf
      %v383 = vrot.slane %v382, 4
      %v384 = vmax.f32 %v382, %v383
      %v385 = vrot.slane %v384, 2
      %v386 = vmax.f32 %v384, %v385
      %v387 = vrot.slane %v386, 1
      %v388 = vmax.f32 %v386, %v387
      %v389 = vsel %vm367, %v360, -inf
      %v390 = vrot.slane %v389, 4
      %v391 = vmax.f32 %v389, %v390
      %v392 = vrot.slane %v391, 2
      %v393 = vmax.f32 %v391, %v392
      %v394 = vrot.slane %v393, 1
      %v395 = vmax.f32 %v393, %v394
      %v396 = vsel %vm367, %v353, -inf
      %v397 = vrot.slane %v396, 4
      %v398 = vmax.f32 %v396, %v397
      %v399 = vrot.slane %v398, 2
      %v400 = vmax.f32 %v398, %v399
      %v401 = vrot.slane %v400, 1
      %v402 = vmax.f32 %v400, %v401
      %v403 = vsel %vm367, %v361, -inf
      %v404 = vrot.slane %v403, 4
      %v405 = vmax.f32 %v403, %v404
      %v406 = vrot.slane %v405, 2
      %v407 = vmax.f32 %v405, %v406
      %v408 = vrot.slane %v407, 1
      %v409 = vmax.f32 %v407, %v408
      %v410 = vsel %vm367, %v354, -inf
      %v411 = vrot.slane %v410, 4
      %v412 = vmax.f32 %v410, %v411
      %v413 = vrot.slane %v412, 2
      %v414 = vmax.f32 %v412, %v413
      %v415 = vrot.slane %v414, 1
      %v416 = vmax.f32 %v414, %v415
      %v417 = vsel %vm367, %v362, -inf
      %v418 = vrot.slane %v417, 4
      %v419 = vmax.f32 %v417, %v418
      %v420 = vrot.slane %v419, 2
      %v421 = vmax.f32 %v419, %v420
      %v422 = vrot.slane %v421, 1
      %v423 = vmax.f32 %v421, %v422
      %vm432 = vcmask 1041409
      %v433 = vsel %vm432, %v381, %v374
      %vm434 = vcmask 1042434
      %v435 = vsel %vm434, %v388, %v433
      %vm436 = vcmask 1043459
      %v437 = vsel %vm436, %v395, %v435
      %vm438 = vcmask 1044484
      %v439 = vsel %vm438, %v402, %v437
      %vm440 = vcmask 1045509
      %v441 = vsel %vm440, %v409, %v439
      %vm442 = vcmask 1046534
      %v443 = vsel %vm442, %v416, %v441
      %vm444 = vcmask 1047559
      %v445 = vsel %vm444, %v423, %v443
      %447 = vst [vmem:[%s214] sm:$0xff] %v445
      %p448 = scmp.lt.s32.totalorder %s18, 1
      %s449 = scalar_select %p448, %s18, 1
      %p450 = scmp.lt.s32.totalorder %s19, 0
      %s451 = scalar_select %p450, %s19, 0
      %s452 = sadd.s32 %s451, %s449
      %s453 = smul.addr %s452, 8
      %s454 = scalar_lea.vmem %s3, %s453
      // Predicated region
      $region33: #{tpu_custom_call.1} parent=31 // pred_check
        %p455 = pneg %p116
      $region34: #{tpu_custom_call.1} parent=31 // pred_check_branch
        %457 = sbr.rel (%p455) target = $region36
      $region35: #{tpu_custom_call.1} parent=31 // pred_region
        _
      $region36: #{tpu_custom_call.1} parent=31 // pred_fallthru
        _
    $region32: #{tpu_custom_call.1} parent=5 // pred_fallthru
      _
    %p458 = scmp.le.s32.totalorder 2, %s9
    // Predicated region
    $region37: #{tpu_custom_call.1} parent=5 // pred_check
      %p459 = pneg %p458
    $region38: #{tpu_custom_call.1} parent=5 // pred_check_branch
      %461 = sbr.rel (%p459) target = $region40
    $region39: #{tpu_custom_call.1} parent=5 // pred_region
      %s462 = ssub.s32 %s9, 2
      // Predicated region
      $region41: #{tpu_custom_call.1} parent=39 // pred_check
        %p463 = pneg %p122
      $region42: #{tpu_custom_call.1} parent=39 // pred_check_branch
        %465 = sbr.rel (%p463) target = $region44
      $region43: #{tpu_custom_call.1} parent=39 // pred_region
        %p466 = scmp.lt.s32.totalorder %s20, 1
        %s467 = scalar_select %p466, %s20, 1
        %p468 = scmp.lt.s32.totalorder %s21, 0
        %s469 = scalar_select %p468, %s21, 0
        %s470 = sadd.s32 %s469, %s467
        %s471 = smul.addr %s470, 8
        %s472 = scalar_lea.vmem %s3, %s471
      $region44: #{tpu_custom_call.1} parent=39 // pred_fallthru
        _
    $region40: #{tpu_custom_call.1} parent=5 // pred_fallthru
      _
  $region6: #{tpu_custom_call.1} parent=0 // loop_footer
    %s13 = sadd.s32 1, %s9
  $region7: #{tpu_custom_call.1} parent=0 // loop_footer_branch
    %8 = sbr.rel target = $region3
  $region8: #{tpu_custom_call.1} parent=0 // loop_exit
    _

</llo_original>
